<compile_context>
chip_gen: v5e
topology: v5e:2x2
jax: 0.10.0
libtpu: 0.0.40
codegen_flags: <defaults>
</compile_context>

<pallas_src>
import jax
import jax.numpy as jnp
from jax.experimental import pallas as pl
from jax.experimental.pallas import tpu as pltpu

NUM_ATTACK_TYPES = 5   # NUM_ATTACK_TYPES global from the reference code
HP = 128               # lane-padded hidden / output width


def tcpnet_kernel(ax_ref, adj_ref, pooladj_ref, w_ref, v_ref, out_ref):
    # One (8, HP) f32 vreg holding: W1 row, b1, b2, b3L (=b3@LW1+lb1), lb2.
    v = v_ref[...]
    w1, b1, b2, b3l, lb2 = v[0:1], v[1:2], v[2:3], v[3:4], v[4:5]

    adj = adj_ref[...]                                    # (N, N) bf16 A_hat

    # --- GCNConv 1 (rank-1 fold; adj @ x precomputed in the jitted wrapper) ---
    h = jnp.maximum(ax_ref[...] * w1 + b1, 0.0)           # (N, HP) f32

    # --- GCNConv 2: relu(adj @ (h @ W2) + b2) ---
    hw = jnp.dot(h.astype(jnp.bfloat16), w_ref[0],
                 preferred_element_type=jnp.float32)      # (N, HP)
    h = jnp.maximum(
        jnp.dot(adj, hw.astype(jnp.bfloat16),
                preferred_element_type=jnp.float32) + b2, 0.0)

    # --- GCNConv 3 + global_mean_pool + lin1 (folded):
    #     relu((pool_adj @ h) @ (W3 @ LW1) + (b3 @ LW1 + lb1)) ---
    t = jnp.dot(pooladj_ref[...], h.astype(jnp.bfloat16),
                preferred_element_type=jnp.float32)       # (G, HP)
    g = jnp.maximum(
        jnp.dot(t.astype(jnp.bfloat16), w_ref[1],
                preferred_element_type=jnp.float32) + b3l, 0.0)

    # --- lin2 (lane-dense output; real logits are columns [:NUM_ATTACK_TYPES]) ---
    out_ref[...] = jnp.dot(g.astype(jnp.bfloat16), w_ref[2],
                           preferred_element_type=jnp.float32) + lb2


def _pad2d(a, rows, cols):
    return jnp.pad(a, ((0, rows - a.shape[0]), (0, cols - a.shape[1])))


def prepare_tcpnet(adj_hat, pool, params, hidden):
    """One-time packing of graph structure + parameters (hoisted out of forward)."""
    (w1, b1, w2, b2, w3, b3, lw1, lb1, lw2, lb2) = params

    # Fuse mean-pool into layer-3 propagation (valid: pool rows sum to 1).
    pool_adj = pool @ adj_hat                                           # (G, N) f32

    # Fold lin1 into conv3 (no ReLU between them), in f32.
    w3l = w3 @ lw1                                                      # (h, h)
    b3l = b3 @ lw1 + lb1                                                # (1, h)

    # Stack the three remaining (hidden x hidden)-ish weights, padded, bf16.
    wstack = jnp.stack([
        _pad2d(w2, HP, HP), _pad2d(w3l, HP, HP), _pad2d(lw2, HP, HP),
    ]).astype(jnp.bfloat16)                                             # (3, HP, HP)

    # Pack conv1 weight row + all biases into one (8, HP) f32 array.
    vecs = jnp.zeros((8, HP), jnp.float32)
    vecs = vecs.at[0, :hidden].set(w1[0])
    vecs = vecs.at[1, :hidden].set(b1[0])
    vecs = vecs.at[2, :hidden].set(b2[0])
    vecs = vecs.at[3, :hidden].set(b3l[0])
    vecs = vecs.at[4, :NUM_ATTACK_TYPES].set(lb2[0])

    return (adj_hat,                               # f32, for the layer-1 matvec
            adj_hat.astype(jnp.bfloat16),          # bf16 kernel operand
            pool_adj.astype(jnp.bfloat16),
            wstack, vecs)


@jax.jit
def tcpnet_forward(x, adj_f32, adj_bf16, pooladj_bf16, wstack, vecs):
    num_graphs = pooladj_bf16.shape[0]

    # Degenerate 1-feature layer-1 propagation: cheap f32 matvec in the wrapper.
    ax = adj_f32 @ x                                                    # (N, 1) f32

    vmem = pl.BlockSpec(memory_space=pltpu.MemorySpace.VMEM)
    out = pl.pallas_call(
        tcpnet_kernel,
        out_shape=jax.ShapeDtypeStruct((num_graphs, HP), jnp.float32),
        in_specs=[vmem] * 5,
        out_specs=vmem,
    )(ax, adj_bf16, pooladj_bf16, wstack, vecs)
    return out[:, :NUM_ATTACK_TYPES]


def build_graph(num_nodes, nodes_per_graph):
    """Ring graph per connected component; returns A_hat and mean-pool matrix."""
    num_graphs = num_nodes // nodes_per_graph
    adj = jnp.zeros((num_nodes, num_nodes), jnp.float32)
    for g in range(num_graphs):
        base = g * nodes_per_graph
        for i in range(nodes_per_graph):
            src = base + i
            dst = base + (i + 1) % nodes_per_graph
            adj = adj.at[src, dst].set(1.0)
            adj = adj.at[dst, src].set(1.0)
    adj = adj + jnp.eye(num_nodes, dtype=jnp.float32)   # GCNConv add_self_loops=True
    deg = jnp.sum(adj, axis=1)
    dinv = 1.0 / jnp.sqrt(deg)
    adj_hat = adj * dinv[:, None] * dinv[None, :]
    batch = jnp.repeat(jnp.arange(num_graphs), nodes_per_graph)
    onehot = (batch[None, :] == jnp.arange(num_graphs)[:, None]).astype(jnp.float32)
    pool = onehot / jnp.sum(onehot, axis=1, keepdims=True)
    return adj_hat, pool


def init_params(key, hidden):
    ks = jax.random.split(key, 10)

    def u(k, shape, fan_in):
        bound = 1.0 / jnp.sqrt(jnp.maximum(fan_in, 1.0))
        return jax.random.uniform(k, shape, jnp.float32, -bound, bound)

    w1 = u(ks[0], (1, hidden), 1)
    b1 = u(ks[1], (1, hidden), hidden)
    w2 = u(ks[2], (hidden, hidden), hidden)
    b2 = u(ks[3], (1, hidden), hidden)
    w3 = u(ks[4], (hidden, hidden), hidden)
    b3 = u(ks[5], (1, hidden), hidden)
    lw1 = u(ks[6], (hidden, hidden), hidden)
    lb1 = u(ks[7], (1, hidden), hidden)
    lw2 = u(ks[8], (hidden, NUM_ATTACK_TYPES), hidden)
    lb2 = u(ks[9], (1, NUM_ATTACK_TYPES), hidden)
    return (w1, b1, w2, b2, w3, b3, lw1, lb1, lw2, lb2)


def tcpnet_reference_f32(x, adj_hat, pool, params):
    """Pure-f32 reference of the original forward pass."""
    (w1, b1, w2, b2, w3, b3, lw1, lb1, lw2, lb2) = params
    h = jnp.maximum(adj_hat @ (x @ w1) + b1, 0.0)
    h = jnp.maximum(adj_hat @ (h @ w2) + b2, 0.0)
    h = adj_hat @ (h @ w3) + b3
    g = pool @ h
    g = jnp.maximum(g @ lw1 + lb1, 0.0)
    return g @ lw2 + lb2


def tcpnet_reference_bf16(x, adj_hat, pool, params):
    """Reference with the same algebraic rewrites and bf16-MXU / f32-accum math."""
    (w1, b1, w2, b2, w3, b3, lw1, lb1, lw2, lb2) = params
    bf = lambda a: a.astype(jnp.bfloat16)
    dot = lambda a, b: jnp.dot(bf(a), bf(b), preferred_element_type=jnp.float32)
    pool_adj = pool @ adj_hat
    w3l = w3 @ lw1                                        # lin1 folded into conv3 (f32)
    b3l = b3 @ lw1 + lb1
    ax = adj_hat @ x                                      # f32 layer-1 matvec
    h = jnp.maximum(ax * w1 + b1, 0.0)                    # rank-1 fold
    h = jnp.maximum(dot(adj_hat, dot(h, w2)) + b2, 0.0)
    t = dot(pool_adj, h)                                  # pool-first reassociation
    g = jnp.maximum(dot(t, w3l) + b3l, 0.0)
    return dot(g, lw2) + lb2


if __name__ == "__main__":
    hidden = 32
    nodes_per_graph = 8
    num_graphs = 2
    num_nodes = nodes_per_graph * num_graphs

    key = jax.random.PRNGKey(0)
    kx, kp = jax.random.split(key)

    x = jax.random.normal(kx, (num_nodes, 1), jnp.float32)   # node features (in_channels=1)
    adj_hat, pool = build_graph(num_nodes, nodes_per_graph)
    params = init_params(kp, hidden)

    # One-time packing (graph + parameters are static across calls).
    packed = prepare_tcpnet(adj_hat, pool, params, hidden)

    out = tcpnet_forward(x, *packed)
    out = jax.block_until_ready(out)
    assert out.shape == (num_graphs, NUM_ATTACK_TYPES)

    # Tight check against a reference using identical rewrites + bf16-MXU math.
    ref_bf16 = tcpnet_reference_bf16(x, adj_hat, pool, params)
    assert jnp.allclose(out, ref_bf16, atol=2e-3, rtol=2e-3)

    # Loose check against the pure-f32 original forward pass (bf16 rounding only).
    ref_f32 = tcpnet_reference_f32(x, adj_hat, pool, params)
    assert jnp.allclose(out, ref_f32, atol=5e-2, rtol=5e-2)

    print("KERNEL_OK")
</pallas_src>

<mosaic_0001>
module attributes {stable_mosaic.version = 11 : i64} {
  func.func @tcpnet_kernel(%arg0: memref<16x1xf32, #tpu.memory_space<vmem>>, %arg1: memref<16x16xbf16, #tpu.memory_space<vmem>>, %arg2: memref<2x16xbf16, #tpu.memory_space<vmem>>, %arg3: memref<3x128x128xbf16, #tpu.memory_space<vmem>>, %arg4: memref<8x128xf32, #tpu.memory_space<vmem>>, %arg5: memref<2x128xf32, #tpu.memory_space<vmem>>) attributes {dimension_semantics = [], scalar_prefetch = 0 : i64, scratch_operands = 0 : i64, tpu.core_type = #tpu.core_type<tc>} {
    %c0 = arith.constant 0 : index
    %c0_0 = arith.constant 0 : index
    %0 = vector.load %arg4[%c0, %c0_0] : memref<8x128xf32, #tpu.memory_space<vmem>>, vector<8x128xf32>
    %1 = vector.extract_strided_slice %0 {offsets = [0, 0], sizes = [1, 128], strides = [1, 1]} : vector<8x128xf32> to vector<1x128xf32>
    %2 = vector.extract_strided_slice %0 {offsets = [1, 0], sizes = [1, 128], strides = [1, 1]} : vector<8x128xf32> to vector<1x128xf32>
    %3 = vector.extract_strided_slice %0 {offsets = [2, 0], sizes = [1, 128], strides = [1, 1]} : vector<8x128xf32> to vector<1x128xf32>
    %4 = vector.extract_strided_slice %0 {offsets = [3, 0], sizes = [1, 128], strides = [1, 1]} : vector<8x128xf32> to vector<1x128xf32>
    %5 = vector.extract_strided_slice %0 {offsets = [4, 0], sizes = [1, 128], strides = [1, 1]} : vector<8x128xf32> to vector<1x128xf32>
    %c0_1 = arith.constant 0 : index
    %c0_2 = arith.constant 0 : index
    %6 = vector.load %arg1[%c0_1, %c0_2] : memref<16x16xbf16, #tpu.memory_space<vmem>>, vector<16x16xbf16>
    %c0_3 = arith.constant 0 : index
    %c0_4 = arith.constant 0 : index
    %7 = vector.load %arg0[%c0_3, %c0_4] : memref<16x1xf32, #tpu.memory_space<vmem>>, vector<16x1xf32>
    %8 = vector.broadcast %7 : vector<16x1xf32> to vector<16x128xf32>
    %9 = vector.broadcast %1 : vector<1x128xf32> to vector<16x128xf32>
    %10 = arith.mulf %8, %9 : vector<16x128xf32>
    %11 = vector.broadcast %2 : vector<1x128xf32> to vector<16x128xf32>
    %12 = arith.addf %10, %11 : vector<16x128xf32>
    %cst = arith.constant 0.000000e+00 : f32
    %13 = vector.broadcast %cst : f32 to vector<16x128xf32>
    %14 = arith.maximumf %12, %13 : vector<16x128xf32>
    %15 = arith.truncf %14 : vector<16x128xf32> to vector<16x128xbf16>
    %c0_5 = arith.constant 0 : index
    %c0_6 = arith.constant 0 : index
    %c0_7 = arith.constant 0 : index
    %16 = vector.load %arg3[%c0_5, %c0_6, %c0_7] : memref<3x128x128xbf16, #tpu.memory_space<vmem>>, vector<1x128x128xbf16>
    %17 = vector.shape_cast %16 : vector<1x128x128xbf16> to vector<128x128xbf16>
    %cst_8 = arith.constant dense<0.000000e+00> : vector<16x128xf32>
    %18 = tpu.matmul %15, %17, %cst_8 {dimension_numbers = #tpu.dot_dimension_numbers<[1], [0], [0], [1], [0, 0, 1, 1], [], []>} : vector<16x128xbf16>, vector<128x128xbf16>, vector<16x128xf32> -> vector<16x128xf32>
    %19 = arith.truncf %18 : vector<16x128xf32> to vector<16x128xbf16>
    %cst_9 = arith.constant dense<0.000000e+00> : vector<16x128xf32>
    %20 = tpu.matmul %6, %19, %cst_9 {dimension_numbers = #tpu.dot_dimension_numbers<[1], [0], [0], [1], [0, 0, 1, 1], [], []>} : vector<16x16xbf16>, vector<16x128xbf16>, vector<16x128xf32> -> vector<16x128xf32>
    %21 = vector.broadcast %3 : vector<1x128xf32> to vector<16x128xf32>
    %22 = arith.addf %20, %21 : vector<16x128xf32>
    %cst_10 = arith.constant 0.000000e+00 : f32
    %23 = vector.broadcast %cst_10 : f32 to vector<16x128xf32>
    %24 = arith.maximumf %22, %23 : vector<16x128xf32>
    %c0_11 = arith.constant 0 : index
    %c0_12 = arith.constant 0 : index
    %25 = vector.load %arg2[%c0_11, %c0_12] : memref<2x16xbf16, #tpu.memory_space<vmem>>, vector<2x16xbf16>
    %26 = arith.truncf %24 : vector<16x128xf32> to vector<16x128xbf16>
    %cst_13 = arith.constant dense<0.000000e+00> : vector<2x128xf32>
    %27 = tpu.matmul %25, %26, %cst_13 {dimension_numbers = #tpu.dot_dimension_numbers<[1], [0], [0], [1], [0, 0, 1, 1], [], []>} : vector<2x16xbf16>, vector<16x128xbf16>, vector<2x128xf32> -> vector<2x128xf32>
    %28 = arith.truncf %27 : vector<2x128xf32> to vector<2x128xbf16>
    %c1 = arith.constant 1 : index
    %c0_14 = arith.constant 0 : index
    %c0_15 = arith.constant 0 : index
    %29 = vector.load %arg3[%c1, %c0_14, %c0_15] : memref<3x128x128xbf16, #tpu.memory_space<vmem>>, vector<1x128x128xbf16>
    %30 = vector.shape_cast %29 : vector<1x128x128xbf16> to vector<128x128xbf16>
    %cst_16 = arith.constant dense<0.000000e+00> : vector<2x128xf32>
    %31 = tpu.matmul %28, %30, %cst_16 {dimension_numbers = #tpu.dot_dimension_numbers<[1], [0], [0], [1], [0, 0, 1, 1], [], []>} : vector<2x128xbf16>, vector<128x128xbf16>, vector<2x128xf32> -> vector<2x128xf32>
    %32 = vector.broadcast %4 : vector<1x128xf32> to vector<2x128xf32>
    %33 = arith.addf %31, %32 : vector<2x128xf32>
    %cst_17 = arith.constant 0.000000e+00 : f32
    %34 = vector.broadcast %cst_17 : f32 to vector<2x128xf32>
    %35 = arith.maximumf %33, %34 : vector<2x128xf32>
    %36 = arith.truncf %35 : vector<2x128xf32> to vector<2x128xbf16>
    %c2 = arith.constant 2 : index
    %c0_18 = arith.constant 0 : index
    %c0_19 = arith.constant 0 : index
    %37 = vector.load %arg3[%c2, %c0_18, %c0_19] : memref<3x128x128xbf16, #tpu.memory_space<vmem>>, vector<1x128x128xbf16>
    %38 = vector.shape_cast %37 : vector<1x128x128xbf16> to vector<128x128xbf16>
    %cst_20 = arith.constant dense<0.000000e+00> : vector<2x128xf32>
    %39 = tpu.matmul %36, %38, %cst_20 {dimension_numbers = #tpu.dot_dimension_numbers<[1], [0], [0], [1], [0, 0, 1, 1], [], []>} : vector<2x128xbf16>, vector<128x128xbf16>, vector<2x128xf32> -> vector<2x128xf32>
    %40 = vector.broadcast %5 : vector<1x128xf32> to vector<2x128xf32>
    %41 = arith.addf %39, %40 : vector<2x128xf32>
    %c0_21 = arith.constant 0 : index
    %c0_22 = arith.constant 0 : index
    %42 = vector.load %arg5[%c0_21, %c0_22] : memref<2x128xf32, #tpu.memory_space<vmem>>, vector<2x128xf32>
    tpu.vector_store %arg5[%c0_21, %c0_22], %41 {strides = array<i32>} : memref<2x128xf32, #tpu.memory_space<vmem>>, vector<2x128xf32>,
    return
  }
}

</mosaic_0001>

<llo_original>
// kernel: tcpnet_forward.1
$region0: #{tcpnet_forward.1}
  #allocation0 [shape = 'u32[]', space=smem, size = 0x4, offset = 0x4, fixed_abs, tag = 'smem constant byte address 0x4 - core index']
  #allocation1 [shape = 'u32[72,128]{1,0:T(1,128)}', space=vmem, size = 0x9000, scoped, tag = 'internal scratch']
  %s0 = inlined_call_operand.vmem [shape: f32[16,1], index: 0, kind: input, shape index: {}]
  %s1 = inlined_call_operand.vmem [shape: bf16[16,16], index: 1, kind: input, shape index: {}]
  %s2 = inlined_call_operand.vmem [shape: bf16[2,16], index: 2, kind: input, shape index: {}]
  %s3 = inlined_call_operand.hbm [shape: bf16[3,128,128], index: 3, kind: input, shape index: {}]
  %s4 = inlined_call_operand.vmem [shape: f32[8,128], index: 4, kind: input, shape index: {}]
  %s5 = inlined_call_operand.hbm [shape: f32[2,128], index: 5, kind: output, shape index: {}]
  %s6 = sld [smem:[#allocation0]]
  $region34: #{tcpnet_forward.1} parent=0
    _
  %s8 = ssub.s32 1, %s6
  %s9 = scalar_select 0, %s8, %s6
  $region1: #{tcpnet_forward.1} parent=0
    #allocation2 [shape = 'u8[98304]{0}', space=vmem, size = 0x18000, scoped, tag = 'input window, operand 3, single buffered']
    #allocation3 [shape = 's32[1]{0}', space=sflag, size = 0x4, scoped, tag = 'scoped memory for tcpnet_forward.1']
    #allocation4 [shape = 's32[1]{0}', space=sflag, size = 0x4, scoped, tag = 'scoped memory for tcpnet_forward.1']
    #allocation5 [shape = 'u8[1024]{0}', space=vmem, size = 0x400, scoped, tag = 'output window, operand 0, single buffered']
    %10 = vsyncpa [#allocation3], 0
    %11 = vsyncpa [#allocation4], 0
    // Predicated region
    $region2: #{tcpnet_forward.1} parent=1 // pred_check
      _
    $region3: #{tcpnet_forward.1} parent=1 // pred_check_branch
      %13 = sbr.rel (0) target = $region5
    $region4: #{tcpnet_forward.1} parent=1 // pred_region
      _
    $region5: #{tcpnet_forward.1} parent=1 // pred_fallthru
      _
    // Predicated region
    $region6: #{tcpnet_forward.1} parent=1 // pred_check
      _
    $region7: #{tcpnet_forward.1} parent=1 // pred_check_branch
      %15 = sbr.rel (0) target = $region9
    $region8: #{tcpnet_forward.1} parent=1 // pred_region
      _
    $region9: #{tcpnet_forward.1} parent=1 // pred_fallthru
      _
    // Predicated region
    $region10: #{tcpnet_forward.1} parent=1 // pred_check
      _
    $region11: #{tcpnet_forward.1} parent=1 // pred_check_branch
      %17 = sbr.rel (0) target = $region13
    $region12: #{tcpnet_forward.1} parent=1 // pred_region
      _
    $region13: #{tcpnet_forward.1} parent=1 // pred_fallthru
      _
    // Predicated region
    $region14: #{tcpnet_forward.1} parent=1 // pred_check
      _
    $region15: #{tcpnet_forward.1} parent=1 // pred_check_branch
      %19 = sbr.rel (0) target = $region17
    $region16: #{tcpnet_forward.1} parent=1 // pred_region
      %21 = vsyncadd [#allocation3], 0
      %s22 = sshll.u32 %s3, 4
      %s23 = int_to_ptr.hbm [resolvable:$true] %s22
      %s24 = sshll.u32 [#allocation2], 4
      %s25 = int_to_ptr.vmem [resolvable:$true] %s24
      %30 = dma.hbm_to_vmem [thread:$0]  %s23, 3072, %s25, [#allocation3], 64, 64, 4
    $region17: #{tcpnet_forward.1} parent=1 // pred_fallthru
      _
    // Predicated region
    $region18: #{tcpnet_forward.1} parent=1 // pred_check
      _
    $region19: #{tcpnet_forward.1} parent=1 // pred_check_branch
      %32 = sbr.rel (0) target = $region21
    $region20: #{tcpnet_forward.1} parent=1 // pred_region
      _
    $region21: #{tcpnet_forward.1} parent=1 // pred_fallthru
      _
    // Predicated region
    $region22: #{tcpnet_forward.1} parent=1 // pred_check
      _
    $region23: #{tcpnet_forward.1} parent=1 // pred_check_branch
      %34 = sbr.rel (0) target = $region25
    $region24: #{tcpnet_forward.1} parent=1 // pred_region
      %36 = dma.done [#allocation3], 3072
    $region25: #{tcpnet_forward.1} parent=1 // pred_fallthru
      _
    %v38 = vld [vmem:[%s4] sm:$0xff]
    %v39 = vld [vmem:[%s1] sm:$0xf]
    %v40 = vld [vmem:[%s1 + $0x4] sm:$0xf]
    %v41 = vld [vmem:[%s0] sm:$0xff]
    %v42 = vld [vmem:[%s0 + $0x8] sm:$0xff]
    %44 = vset.pattern.permute.xlu0 0
    %45 = vperm.xlu0 %44, %v41
    %v46 = vpop.permute.xlu0 %45
    %49 = vset.pattern.permute.xlu0 0
    %50 = vperm.xlu0 %49, %v42
    %v51 = vpop.permute.xlu0 %50
    %v53 = vperm.slane %v38, 0
    %v54 = vmul.f32 %v46, %v53
    %v55 = vmul.f32 %v51, %v53
    %v56 = vperm.slane %v38, 1
    %v57 = vadd.f32 %v54, %v56
    %v58 = vadd.f32 %v55, %v56
    %v59 = vmax.f32 %v57, 0.0
    %v60 = vmax.f32 %v58, 0.0
    %v61 = vpack.c.bf16 %v60, %v59
    %v62 = vld [vmem:[#allocation2] sm:$0xf]
    %v63 = vld [vmem:[#allocation2 + $0x4] sm:$0xf]
    %v64 = vld [vmem:[#allocation2 + $0x8] sm:$0xf]
    %v65 = vld [vmem:[#allocation2 + $0xc] sm:$0xf]
    %v66 = vld [vmem:[#allocation2 + $0x10] sm:$0xf]
    %v67 = vld [vmem:[#allocation2 + $0x14] sm:$0xf]
    %v68 = vld [vmem:[#allocation2 + $0x18] sm:$0xf]
    %v69 = vld [vmem:[#allocation2 + $0x1c] sm:$0xf]
    %v70 = vld [vmem:[#allocation2 + $0x20] sm:$0xf]
    %v71 = vld [vmem:[#allocation2 + $0x24] sm:$0xf]
    %v72 = vld [vmem:[#allocation2 + $0x28] sm:$0xf]
    %v73 = vld [vmem:[#allocation2 + $0x2c] sm:$0xf]
    %v74 = vld [vmem:[#allocation2 + $0x30] sm:$0xf]
    %v75 = vld [vmem:[#allocation2 + $0x34] sm:$0xf]
    %v76 = vld [vmem:[#allocation2 + $0x38] sm:$0xf]
    %v77 = vld [vmem:[#allocation2 + $0x3c] sm:$0xf]
    %v94 = vunpack.c.l.b16 %v62
    %v95 = vunpack.c.l.b16 %v63
    %v96 = vunpack.c.l.b16 %v64
    %v97 = vunpack.c.l.b16 %v65
    %v98 = vunpack.c.l.b16 %v66
    %v99 = vunpack.c.l.b16 %v67
    %v100 = vunpack.c.l.b16 %v68
    %v101 = vunpack.c.l.b16 %v69
    %v102 = vunpack.c.l.b16 %v70
    %v103 = vunpack.c.l.b16 %v71
    %v104 = vunpack.c.l.b16 %v72
    %v105 = vunpack.c.l.b16 %v73
    %v106 = vunpack.c.l.b16 %v74
    %v107 = vunpack.c.l.b16 %v75
    %v108 = vunpack.c.l.b16 %v76
    %v109 = vunpack.c.l.b16 %v77
    %v110 = vpack.c.b16 %v95, %v94
    %v111 = vpack.c.b16 %v97, %v96
    %v112 = vpack.c.b16 %v99, %v98
    %v113 = vpack.c.b16 %v101, %v100
    %v114 = vpack.c.b16 %v103, %v102
    %v115 = vpack.c.b16 %v105, %v104
    %v116 = vpack.c.b16 %v107, %v106
    %v117 = vpack.c.b16 %v109, %v108
    %126 = vmatpush.bf16.msra.mxu0 %v117
    %127 = vmatpush.bf16.msra.mxu0 %v116
    %128 = vmatpush.bf16.msra.mxu0 %v115
    %129 = vmatpush.bf16.msra.mxu0 %v114
    %130 = vmatpush.bf16.msra.mxu0 %v113
    %131 = vmatpush.bf16.msra.mxu0 %v112
    %132 = vmatpush.bf16.msra.mxu0 %v111
    %133 = vmatpush.bf16.msra.mxu0 %v110
    %134 = vmatmul.bf16.gmra.mxu0 %v61
    %v135 = vpop.f32.mrf.mxu0
    %v136 = vadd.f32 0.0, %v135
    %v137 = vpop.f32.mrf.mxu0
    %v138 = vadd.f32 0.0, %v137
    %139 = vdwg.mxu0
    %v140 = vpack.c.bf16 %v138, %v136
    %v141 = vperm.slane %v38, 2
    %v144 = vunpack.c.l.b16 %v39
    %v145 = vunpack.c.l.b16 %v40
    %v146 = vpack.c.b16 %v145, %v144
    %vm147 = vcmask 130048
    %v149 = vsel %vm147, %v146, 0
    %151 = vmatpush.bf16.msra.mxu0 0
    %152 = vmatpush.bf16.msra.mxu0 0
    %153 = vmatpush.bf16.msra.mxu0 0
    %154 = vmatpush.bf16.msra.mxu0 0
    %155 = vmatpush.bf16.msra.mxu0 0
    %156 = vmatpush.bf16.msra.mxu0 0
    %157 = vmatpush.bf16.msra.mxu0 0
    %158 = vmatpush.bf16.msra.mxu0 %v140
    %159 = vmatmul.bf16.gmra.mxu0 %v149
    %v160 = vpop.f32.mrf.mxu0
    %v161 = vadd.f32 %v141, %v160
    %v162 = vpop.f32.mrf.mxu0
    %v163 = vadd.f32 %v141, %v162
    %164 = vdwg.mxu0
    %v165 = vmax.f32 %v161, 0.0
    %v166 = vmax.f32 %v163, 0.0
    %v167 = vld [vmem:[%s2] sm:$0x1]
    %v168 = vpack.c.bf16 %v166, %v165
    %v170 = vsel %vm147, %v167, 0
    %172 = vmatpush.bf16.msra.mxu0 0
    %173 = vmatpush.bf16.msra.mxu0 0
    %174 = vmatpush.bf16.msra.mxu0 0
    %175 = vmatpush.bf16.msra.mxu0 0
    %176 = vmatpush.bf16.msra.mxu0 0
    %177 = vmatpush.bf16.msra.mxu0 0
    %178 = vmatpush.bf16.msra.mxu0 0
    %179 = vmatpush.bf16.msra.mxu0 %v168
    %180 = vmatmul.bf16.gmra.mxu0 %v170
    %v181 = vpop.f32.mrf.mxu0
    %v182 = vadd.f32 0.0, %v181
    %v183 = vpop.f32.mrf.mxu0
    %184 = vdwg.mxu0
    %v185 = vpack.c.bf16 %v182, %v182
    %s186 = scalar_lea.vmem [#allocation2], 64
    %v187 = vld [vmem:[%s186] sm:$0xf]
    %v188 = vld [vmem:[%s186 + $0x4] sm:$0xf]
    %v189 = vld [vmem:[%s186 + $0x8] sm:$0xf]
    %v190 = vld [vmem:[%s186 + $0xc] sm:$0xf]
    %v191 = vld [vmem:[%s186 + $0x10] sm:$0xf]
    %v192 = vld [vmem:[%s186 + $0x14] sm:$0xf]
    %v193 = vld [vmem:[%s186 + $0x18] sm:$0xf]
    %v194 = vld [vmem:[%s186 + $0x1c] sm:$0xf]
    %v195 = vld [vmem:[%s186 + $0x20] sm:$0xf]
    %v196 = vld [vmem:[%s186 + $0x24] sm:$0xf]
    %v197 = vld [vmem:[%s186 + $0x28] sm:$0xf]
    %v198 = vld [vmem:[%s186 + $0x2c] sm:$0xf]
    %v199 = vld [vmem:[%s186 + $0x30] sm:$0xf]
    %v200 = vld [vmem:[%s186 + $0x34] sm:$0xf]
    %v201 = vld [vmem:[%s186 + $0x38] sm:$0xf]
    %v202 = vld [vmem:[%s186 + $0x3c] sm:$0xf]
    %v203 = vperm.slane %v38, 3
    %v220 = vunpack.c.l.b16 %v187
    %v221 = vunpack.c.l.b16 %v188
    %v222 = vunpack.c.l.b16 %v189
    %v223 = vunpack.c.l.b16 %v190
    %v224 = vunpack.c.l.b16 %v191
    %v225 = vunpack.c.l.b16 %v192
    %v226 = vunpack.c.l.b16 %v193
    %v227 = vunpack.c.l.b16 %v194
    %v228 = vunpack.c.l.b16 %v195
    %v229 = vunpack.c.l.b16 %v196
    %v230 = vunpack.c.l.b16 %v197
    %v231 = vunpack.c.l.b16 %v198
    %v232 = vunpack.c.l.b16 %v199
    %v233 = vunpack.c.l.b16 %v200
    %v234 = vunpack.c.l.b16 %v201
    %v235 = vunpack.c.l.b16 %v202
    %v236 = vpack.c.b16 %v221, %v220
    %v237 = vpack.c.b16 %v223, %v222
    %v238 = vpack.c.b16 %v225, %v224
    %v239 = vpack.c.b16 %v227, %v226
    %v240 = vpack.c.b16 %v229, %v228
    %v241 = vpack.c.b16 %v231, %v230
    %v242 = vpack.c.b16 %v233, %v232
    %v243 = vpack.c.b16 %v235, %v234
    %252 = vmatpush.bf16.msra.mxu0 %v243
    %253 = vmatpush.bf16.msra.mxu0 %v242
    %254 = vmatpush.bf16.msra.mxu0 %v241
    %255 = vmatpush.bf16.msra.mxu0 %v240
    %256 = vmatpush.bf16.msra.mxu0 %v239
    %257 = vmatpush.bf16.msra.mxu0 %v238
    %258 = vmatpush.bf16.msra.mxu0 %v237
    %259 = vmatpush.bf16.msra.mxu0 %v236
    %260 = vmatmul.bf16.gmra.mxu0 %v185
    %v261 = vpop.f32.mrf.mxu0
    %v262 = vadd.f32 %v203, %v261
    %v263 = vpop.f32.mrf.mxu0
    %264 = vdwg.mxu0
    %v265 = vmax.f32 %v262, 0.0
    %v266 = vpack.c.bf16 %v265, %v265
    %s267 = scalar_lea.vmem [#allocation2], 128
    %v268 = vld [vmem:[%s267] sm:$0xf]
    %v269 = vld [vmem:[%s267 + $0x4] sm:$0xf]
    %v270 = vld [vmem:[%s267 + $0x8] sm:$0xf]
    %v271 = vld [vmem:[%s267 + $0xc] sm:$0xf]
    %v272 = vld [vmem:[%s267 + $0x10] sm:$0xf]
    %v273 = vld [vmem:[%s267 + $0x14] sm:$0xf]
    %v274 = vld [vmem:[%s267 + $0x18] sm:$0xf]
    %v275 = vld [vmem:[%s267 + $0x1c] sm:$0xf]
    %v276 = vld [vmem:[%s267 + $0x20] sm:$0xf]
    %v277 = vld [vmem:[%s267 + $0x24] sm:$0xf]
    %v278 = vld [vmem:[%s267 + $0x28] sm:$0xf]
    %v279 = vld [vmem:[%s267 + $0x2c] sm:$0xf]
    %v280 = vld [vmem:[%s267 + $0x30] sm:$0xf]
    %v281 = vld [vmem:[%s267 + $0x34] sm:$0xf]
    %v282 = vld [vmem:[%s267 + $0x38] sm:$0xf]
    %v283 = vld [vmem:[%s267 + $0x3c] sm:$0xf]
    %v284 = vperm.slane %v38, 4
    %v301 = vunpack.c.l.b16 %v268
    %v302 = vunpack.c.l.b16 %v269
    %v303 = vunpack.c.l.b16 %v270
    %v304 = vunpack.c.l.b16 %v271
    %v305 = vunpack.c.l.b16 %v272
    %v306 = vunpack.c.l.b16 %v273
    %v307 = vunpack.c.l.b16 %v274
    %v308 = vunpack.c.l.b16 %v275
    %v309 = vunpack.c.l.b16 %v276
    %v310 = vunpack.c.l.b16 %v277
    %v311 = vunpack.c.l.b16 %v278
    %v312 = vunpack.c.l.b16 %v279
    %v313 = vunpack.c.l.b16 %v280
    %v314 = vunpack.c.l.b16 %v281
    %v315 = vunpack.c.l.b16 %v282
    %v316 = vunpack.c.l.b16 %v283
    %v317 = vpack.c.b16 %v302, %v301
    %v318 = vpack.c.b16 %v304, %v303
    %v319 = vpack.c.b16 %v306, %v305
    %v320 = vpack.c.b16 %v308, %v307
    %v321 = vpack.c.b16 %v310, %v309
    %v322 = vpack.c.b16 %v312, %v311
    %v323 = vpack.c.b16 %v314, %v313
    %v324 = vpack.c.b16 %v316, %v315
    %333 = vmatpush.bf16.msra.mxu0 %v324
    %334 = vmatpush.bf16.msra.mxu0 %v323
    %335 = vmatpush.bf16.msra.mxu0 %v322
    %336 = vmatpush.bf16.msra.mxu0 %v321
    %337 = vmatpush.bf16.msra.mxu0 %v320
    %338 = vmatpush.bf16.msra.mxu0 %v319
    %339 = vmatpush.bf16.msra.mxu0 %v318
    %340 = vmatpush.bf16.msra.mxu0 %v317
    %341 = vmatmul.bf16.gmra.mxu0 %v266
    %v342 = vpop.f32.mrf.mxu0
    %v343 = vadd.f32 %v284, %v342
    %v344 = vpop.f32.mrf.mxu0
    %345 = vdwg.mxu0
    %346 = vst [vmem:[#allocation5] sm:$0x3] %v343
    // Predicated region
    $region26: #{tcpnet_forward.1} parent=1 // pred_check
      _
    $region27: #{tcpnet_forward.1} parent=1 // pred_check_branch
      %348 = sbr.rel (0) target = $region29
    $region28: #{tcpnet_forward.1} parent=1 // pred_region
      %350 = vsyncadd [#allocation4], 0
      %s352 = sshll.u32 [#allocation5], 4
      %s353 = int_to_ptr.vmem [resolvable:$true] %s352
      %s354 = sshll.u32 %s5, 4
      %s355 = int_to_ptr.hbm [resolvable:$true] %s354
      %357 = dma.vmem_to_hbm [thread:$0]  %s353, 32, %s355, [#allocation4]
    $region29: #{tcpnet_forward.1} parent=1 // pred_fallthru
      _
    // Predicated region
    $region30: #{tcpnet_forward.1} parent=1 // pred_check
      _
    $region31: #{tcpnet_forward.1} parent=1 // pred_check_branch
      %359 = sbr.rel (0) target = $region33
    $region32: #{tcpnet_forward.1} parent=1 // pred_region
      %361 = dma.done [#allocation4], 32
    $region33: #{tcpnet_forward.1} parent=1 // pred_fallthru
      _
    %362 = vsyncpa [#allocation3], 1
    %363 = vsyncpa [#allocation4], 1

</llo_original>
